<compile_context>
chip_gen: v6e
topology: v6e:2x2x1
jax: 0.10.0
libtpu: 0.0.40
codegen_flags: <defaults>
</compile_context>

<pallas_src>
import jax
import jax.numpy as jnp
from jax.experimental import pallas as pl
from jax.experimental.pallas import tpu as pltpu


def _value_head_kernel(x_ref, w_ref, b_ref, o_ref):
    # x_ref: (tm, H) VMEM (streamed); w_ref: (1, H) VMEM (resident);
    # b_ref: (1,) SMEM scalar; o_ref: (tm, 1) VMEM.
    x = x_ref[...].astype(jnp.float32)
    w = w_ref[...].astype(jnp.float32)
    # VPU multiply + XLU cross-lane reduce; f32 accumulation.
    s = jnp.sum(x * w, axis=1, keepdims=True)              # (tm, 1) f32
    o_ref[...] = (s + b_ref[0]).astype(o_ref.dtype)


def _round_up(a, b):
    return ((a + b - 1) // b) * b


def value_head_forward(hidden_states, weight, bias, *, tm=None):
    """hidden_states: (B, S, H); weight: (1, H) [PyTorch Linear layout]; bias: (1,)."""
    B, S, H = hidden_states.shape
    M = B * S
    dtype = hidden_states.dtype
    itemsize = jnp.dtype(dtype).itemsize
    sub = max(8, 32 // itemsize)          # sublane multiple: f32 -> 8, bf16 -> 16

    if tm is None:
        # Start big (per-step overhead ~0.35 us) and shrink to fit a ~24 MiB
        # double-buffered input budget (safe wrt v7x's 64 MiB physical VMEM
        # and v5e's 128 MiB once vmem_limit_bytes is raised explicitly).
        budget = 24 * 1024 * 1024
        tm = 2048
        while tm > 128 and 2 * tm * H * itemsize > budget:
            tm //= 2
        # Prefer >= 4 grid steps when M allows: pipelining + an even split of
        # the "parallel" row axis across the two TensorCores on v7x.
        while tm > 256 and pl.cdiv(M, tm) < 4:
            tm //= 2
    # Never use a tile larger than the (sublane-rounded) problem, and keep the
    # row tile sublane-aligned so the (8, 128) block constraint holds.
    tm = max(sub, _round_up(min(tm, _round_up(M, sub)), sub))

    num_tiles = pl.cdiv(M, tm)            # partial last block handled by Pallas

    x = hidden_states.reshape(M, H)       # no jnp.pad: avoids an extra HBM copy
    w = weight.reshape(1, H)              # lane-major weight, resident, no transpose
    b = bias.reshape(1)

    # Explicit scoped-VMEM limit: 2x double-buffered input tiles + output tiles
    # + weight + slack; capped for v7x (64 MiB physical).
    vmem_bytes = (2 * tm * H * itemsize          # double-buffered x tiles
                  + 2 * tm * itemsize            # double-buffered output tiles
                  + 2 * H * itemsize             # weight
                  + (1 << 20))                   # slack
    vmem_limit = int(min(max(vmem_bytes, 16 * 1024 * 1024), 48 * 1024 * 1024))

    cost = pl.CostEstimate(
        flops=2 * M * H,
        transcendentals=0,
        bytes_accessed=M * H * itemsize + M * itemsize + H * itemsize,
    )

    out = pl.pallas_call(
        _value_head_kernel,
        out_shape=jax.ShapeDtypeStruct((M, 1), dtype),
        grid_spec=pltpu.PrefetchScalarGridSpec(
            num_scalar_prefetch=0,
            grid=(num_tiles,),
            in_specs=[
                pl.BlockSpec((tm, H), lambda i: (i, 0)),                 # x row-tile (streamed)
                pl.BlockSpec((1, H), lambda i: (0, 0)),                  # weight (resident)
                pl.BlockSpec(memory_space=pltpu.MemorySpace.SMEM),       # bias scalar in SMEM
            ],
            out_specs=pl.BlockSpec((tm, 1), lambda i: (i, 0)),           # (M, 1) output, no relayout
        ),
        compiler_params=pltpu.CompilerParams(
            dimension_semantics=("parallel",),
            vmem_limit_bytes=vmem_limit,
        ),
        cost_estimate=cost,
    )(x, w, b)

    return out.reshape(B, S, 1)


if __name__ == "__main__":
    key = jax.random.PRNGKey(0)
    k_x, k_w, k_b, k_x2 = jax.random.split(key, 4)

    # Small shapes consistent with the module: batch=2, seq=8, hidden=32.
    B, S, H = 2, 8, 32
    hidden_states = jax.random.normal(k_x, (B, S, H), dtype=jnp.float32)
    weight = jax.random.normal(k_w, (1, H), dtype=jnp.float32) * 0.02
    bias = jax.random.normal(k_b, (1,), dtype=jnp.float32) * 0.02

    out = value_head_forward(hidden_states, weight, bias)
    out = jax.block_until_ready(out)
    ref = hidden_states @ weight.T + bias
    assert out.shape == (B, S, 1), out.shape
    assert jnp.allclose(out, ref, atol=1e-5, rtol=1e-5), "mismatch vs reference (small)"

    # Second check: multi-tile path with a partial last block (M = 1300, tm = 256).
    B2, S2 = 2, 650
    hidden_states2 = jax.random.normal(k_x2, (B2, S2, H), dtype=jnp.float32)
    out2 = value_head_forward(hidden_states2, weight, bias)
    out2 = jax.block_until_ready(out2)
    ref2 = hidden_states2 @ weight.T + bias
    assert out2.shape == (B2, S2, 1), out2.shape
    assert jnp.allclose(out2, ref2, atol=1e-5, rtol=1e-5), "mismatch vs reference (tiled)"

    print("KERNEL_OK")
</pallas_src>

<mosaic_0001>
module attributes {stable_mosaic.version = 11 : i64} {
  func.func @_value_head_kernel(%arg0: i32, %arg1: memref<16x32xf32, #tpu.memory_space<vmem>>, %arg2: memref<1x32xf32, #tpu.memory_space<vmem>>, %arg3: memref<1xf32, #tpu.memory_space<smem>>, %arg4: memref<16x1xf32, #tpu.memory_space<vmem>>) attributes {dimension_semantics = [#tpu.dimension_semantics<parallel>], iteration_bounds = array<i64: 1>, scalar_prefetch = 0 : i64, scratch_operands = 0 : i64, tpu.core_type = #tpu.core_type<tc>, window_params = [{transform_indices = @transform_0, window_bounds = array<i64: 16, 32>}, {pipeline_mode = #tpu.pipeline_mode<synchronous>, transform_indices = @transform_1, window_bounds = array<i64: 1, 32>}, {transform_indices = @transform_2, window_bounds = array<i64: 1>}, {transform_indices = @transform_3, window_bounds = array<i64: 16, 1>}]} {
    %c0 = arith.constant 0 : index
    %c0_0 = arith.constant 0 : index
    %0 = vector.load %arg1[%c0, %c0_0] : memref<16x32xf32, #tpu.memory_space<vmem>>, vector<16x32xf32>
    %c0_1 = arith.constant 0 : index
    %c0_2 = arith.constant 0 : index
    %1 = vector.load %arg2[%c0_1, %c0_2] : memref<1x32xf32, #tpu.memory_space<vmem>>, vector<1x32xf32>
    %2 = vector.broadcast %1 : vector<1x32xf32> to vector<16x32xf32>
    %3 = arith.mulf %0, %2 : vector<16x32xf32>
    %cst = arith.constant dense<0.000000e+00> : vector<16xf32>
    %4 = vector.multi_reduction <add>, %3, %cst [1] : vector<16x32xf32> to vector<16xf32>
    %5 = vector.shape_cast %4 : vector<16xf32> to vector<16x1xf32>
    %c0_3 = arith.constant 0 : index
    %6 = memref.load %arg3[%c0_3] : memref<1xf32, #tpu.memory_space<smem>>
    %7 = vector.broadcast %6 : f32 to vector<16x1xf32>
    %8 = arith.addf %5, %7 : vector<16x1xf32>
    %c0_4 = arith.constant 0 : index
    %c0_5 = arith.constant 0 : index
    %9 = vector.load %arg4[%c0_4, %c0_5] : memref<16x1xf32, #tpu.memory_space<vmem>>, vector<16x1xf32>
    tpu.vector_store %arg4[%c0_4, %c0_5], %8 {strides = array<i32>} : memref<16x1xf32, #tpu.memory_space<vmem>>, vector<16x1xf32>,
    return
  }
  func.func @transform_0(%arg0: i32) -> (i32, i32) {
    %c0_i32 = arith.constant 0 : i32
    %c0_i32_0 = arith.constant 0 : i32
    return %arg0, %c0_i32 : i32, i32
  }
  func.func @transform_1(%arg0: i32) -> (i32, i32) {
    %c0_i32 = arith.constant 0 : i32
    %c0_i32_0 = arith.constant 0 : i32
    %c0_i32_1 = arith.constant 0 : i32
    return %c0_i32, %c0_i32_0 : i32, i32
  }
  func.func @transform_2(%arg0: i32) -> i32 {
    %c0_i32 = arith.constant 0 : i32
    %c0_i32_0 = arith.constant 0 : i32
    return %c0_i32 : i32
  }
  func.func @transform_3(%arg0: i32) -> (i32, i32) {
    %c0_i32 = arith.constant 0 : i32
    %c0_i32_0 = arith.constant 0 : i32
    return %arg0, %c0_i32 : i32, i32
  }
}

</mosaic_0001>

<llo_original>
// kernel: tpu_custom_call.1
$region0: #{tpu_custom_call.1}
  #allocation0 [shape = 'u32[]', space=smem, size = 0x4, offset = 0x4, fixed_abs, tag = 'smem constant byte address 0x4 - core index']
  #allocation1 [shape = 'u32[144,128]{1,0:T(1,128)}', space=vmem, size = 0x12000, scoped, tag = 'internal scratch']
  #allocation2 [shape = 'f32[1]{0:T(128)S(6)}', space=smem, size = 0x200, scoped, tag = 'scoped memory for tpu_custom_call.1']
  %s0 = inlined_call_operand.hbm [shape: f32[16,32], index: 0, kind: input, shape index: {}]
  %s1 = inlined_call_operand.vmem [shape: f32[1,32], index: 1, kind: input, shape index: {}]
  %s2 = inlined_call_operand.<no memory space> [shape: f32[1], index: 2, kind: input, shape index: {}]
  %s3 = inlined_call_operand.vmem [shape: f32[16,1], index: 3, kind: output, shape index: {}]
  %s4 = sld [smem:[#allocation0]]
  $region26: #{tpu_custom_call.1} parent=0
    _
  %s6 = ssub.s32 1, %s4
  %s7 = scalar_select 0, %s6, %s4
  %8 = sst [smem:[#allocation2]] %s2
  $region1: #{tpu_custom_call.1} parent=0
    #allocation3 [shape = 'u8[8192]{0}', space=vmem, size = 0x2000, scoped, tag = 'input window, operand 0, single buffered']
    #allocation4 [shape = 's32[1]{0}', space=sflag, size = 0x4, scoped, tag = 'scoped memory for tpu_custom_call.1']
    %9 = vsyncpa [#allocation4], 0
    // Predicated region
    $region2: #{tpu_custom_call.1} parent=1 // pred_check
      _
    $region3: #{tpu_custom_call.1} parent=1 // pred_check_branch
      %11 = sbr.rel (0) target = $region5
    $region4: #{tpu_custom_call.1} parent=1 // pred_region
      %s13 = ssub.s32 256, 256
      %14 = vsyncadd [#allocation4], %s13
      %s15 = sshll.u32 [#allocation3], 4
      %s16 = int_to_ptr.vmem [resolvable:$true] %s15
      %21 = dma.hbm_to_vmem [thread:$0]  %s0, 256, %s16, [#allocation4], 128, 128, 8
    $region5: #{tpu_custom_call.1} parent=1 // pred_fallthru
      _
    // Predicated region
    $region6: #{tpu_custom_call.1} parent=1 // pred_check
      _
    $region7: #{tpu_custom_call.1} parent=1 // pred_check_branch
      %23 = sbr.rel (0) target = $region9
    $region8: #{tpu_custom_call.1} parent=1 // pred_region
      _
    $region9: #{tpu_custom_call.1} parent=1 // pred_fallthru
      _
    // Predicated region
    $region10: #{tpu_custom_call.1} parent=1 // pred_check
      _
    $region11: #{tpu_custom_call.1} parent=1 // pred_check_branch
      %25 = sbr.rel (0) target = $region13
    $region12: #{tpu_custom_call.1} parent=1 // pred_region
      _
    $region13: #{tpu_custom_call.1} parent=1 // pred_fallthru
      _
    // Predicated region
    $region14: #{tpu_custom_call.1} parent=1 // pred_check
      _
    $region15: #{tpu_custom_call.1} parent=1 // pred_check_branch
      %27 = sbr.rel (0) target = $region17
    $region16: #{tpu_custom_call.1} parent=1 // pred_region
      %28 = dma.done [#allocation4], 256
    $region17: #{tpu_custom_call.1} parent=1 // pred_fallthru
      _
    %v29 = vld [vmem:[#allocation3] sm:$0xff]
    %v30 = vld [vmem:[#allocation3 + $0x8] sm:$0xff]
    %v31 = vld [vmem:[%s1] sm:$0x1]
    %v33 = vlaneseq
    %v34 = vshrl.u32 %v33, 7
    %v35 = vsub.s32 0, %v34
    %v36 = vrot.slane %v31, %v35
    %v38 = vmul.f32 %v29, %v36
    %v39 = vmul.f32 %v30, %v36
    %vm40 = vcmask 261120
    %v41 = vsel %vm40, %v38, 0.0
    %42 = vadd.xlane.f32.xlu0 %v41
    %v43 = vpop.xlane.xlu0 %42
    %v44 = vsel %vm40, %v39, 0.0
    %45 = vadd.xlane.f32.xlu0 %v44
    %v46 = vpop.xlane.xlu0 %45
    %s47 = sld [smem:[#allocation2]]
    %v48 = vstv %s47
    %v49 = vadd.f32 %v43, %v48
    %v50 = vadd.f32 %v46, %v48
    %vm51 = vcmask 7168
    %52 = vst.msk [vmem:[%s3] sm:$0xff] %vm51, %v49
    %53 = vst.msk [vmem:[%s3 + $0x8] sm:$0xff] %vm51, %v50
    // Predicated region
    $region18: #{tpu_custom_call.1} parent=1 // pred_check
      _
    $region19: #{tpu_custom_call.1} parent=1 // pred_check_branch
      %55 = sbr.rel (0) target = $region21
    $region20: #{tpu_custom_call.1} parent=1 // pred_region
      _
    $region21: #{tpu_custom_call.1} parent=1 // pred_fallthru
      _
    // Predicated region
    $region22: #{tpu_custom_call.1} parent=1 // pred_check
      _
    $region23: #{tpu_custom_call.1} parent=1 // pred_check_branch
      %57 = sbr.rel (0) target = $region25
    $region24: #{tpu_custom_call.1} parent=1 // pred_region
      _
    $region25: #{tpu_custom_call.1} parent=1 // pred_fallthru
      _
    %58 = vsyncpa [#allocation4], 1

</llo_original>
